<compile_context>
chip_gen: v7x
topology: tpu7x:2x2x1
jax: 0.10.0
libtpu: 0.0.40
codegen_flags: <defaults>
</compile_context>

<pallas_src>
import jax
import jax.numpy as jnp
from jax.experimental import pallas as pl
from jax.experimental.pallas import tpu as pltpu


# ---------------------------------------------------------------------------
# Kernel 1: ConvTranspose2d(kernel=2, stride=2) + bias   (the "up" of UpConv)
# ---------------------------------------------------------------------------
def _make_up_kernel():
    def kernel(x_ref, w_ref, b_ref, o_ref):
        # x_ref: (1, Cin, HW)   w_ref: (4*Cout, Cin)   b_ref: (4*Cout, 1)
        # o_ref: (1, 4*Cout, HW)   -- channel index = (2*kh + kw)*Cout + c
        y = jnp.dot(w_ref[...], x_ref[0],
                    preferred_element_type=jnp.float32) + b_ref[...]
        o_ref[0] = y.astype(o_ref.dtype)          # single lane-dense store
    return kernel


def conv_transpose_2x2(x, w_all, b_all):
    """x: (B, Cin, H, W) NCHW -> (B, Cout, 2H, 2W) NCHW."""
    B, Cin, H, W = x.shape
    C4 = w_all.shape[0]
    Cout = C4 // 4
    HW = H * W
    out = pl.pallas_call(
        _make_up_kernel(),
        out_shape=jax.ShapeDtypeStruct((B, C4, HW), x.dtype),
        grid=(B,),
        in_specs=[
            pl.BlockSpec((1, Cin, HW), lambda b: (b, 0, 0)),
            pl.BlockSpec((C4, Cin), lambda b: (0, 0)),
            pl.BlockSpec((C4, 1), lambda b: (0, 0)),
        ],
        out_specs=pl.BlockSpec((1, C4, HW), lambda b: (b, 0, 0)),
        compiler_params=pltpu.CompilerParams(
            dimension_semantics=("parallel",),
            vmem_limit_bytes=64 * 1024 * 1024,
        ),
    )(x.reshape(B, Cin, HW), w_all, b_all)
    # (B, [kh,kw,c], H, W) -> (B, c, H, 2, W, 2) -> (B, c, 2H, 2W): one XLA transpose.
    out = out.reshape(B, 2, 2, Cout, H, W)
    out = jnp.transpose(out, (0, 3, 4, 1, 5, 2))
    return out.reshape(B, Cout, 2 * H, 2 * W)


# ---------------------------------------------------------------------------
# Kernel 2: fused [concat(skip, up) -> Conv2d(3x3, padding=1) -> + bias -> ReLU]
# (concat is eliminated by splitting the weight; windows via pltpu.roll + mask)
# ---------------------------------------------------------------------------
def _make_fused_concat_conv3x3_relu_kernel(Hc, Wc, Cs, Cu, Co):
    HW = Hc * Wc

    def kernel(r_ref, c_ref, s_ref, u_ref, ws_ref, wu_ref, b_ref, o_ref):
        # r_ref/c_ref: (1, HW) int32 row / col index of every lane position.
        # s_ref: (1, Cs, HW) skip   u_ref: (1, Cu, HW) upsampled
        # ws_ref: (3, 3, Co, Cs)    wu_ref: (3, 3, Co, Cu)    b_ref: (Co, 1)
        # o_ref: (1, Co, HW)
        s = s_ref[0]
        u = u_ref[0]
        row = r_ref[...]
        col = c_ref[...]

        all_true = row >= 0
        ok_h = (row >= 1, all_true, row <= Hc - 2)   # dh = 0, 1, 2  (offset dh-1)
        ok_w = (col >= 1, all_true, col <= Wc - 2)   # dw = 0, 1, 2  (offset dw-1)

        # Bias added once via a lane-broadcast; f32 accumulator (Co, HW).
        acc = jnp.broadcast_to(b_ref[...], (Co, HW))

        for dh in range(3):
            for dw in range(3):
                d = (dh - 1) * Wc + (dw - 1)         # neighbour offset on the flat axis
                if d == 0:
                    s_win, u_win = s, u              # centre tap: no shift, no mask
                else:
                    shift = (-d) % HW                # static lane rotation (XLU)
                    mask = jnp.logical_and(ok_h[dh], ok_w[dw]).astype(s.dtype)
                    s_win = pltpu.roll(s, shift=shift, axis=1) * mask
                    u_win = pltpu.roll(u, shift=shift, axis=1) * mask
                acc = acc + jnp.dot(ws_ref[dh, dw], s_win,
                                    preferred_element_type=jnp.float32)
                acc = acc + jnp.dot(wu_ref[dh, dw], u_win,
                                    preferred_element_type=jnp.float32)

        o_ref[0] = jnp.maximum(acc, 0.0).astype(o_ref.dtype)

    return kernel


def concat_conv3x3_relu(skip, up, ws, wu, b_col):
    """relu(conv3x3(cat([skip, up], ch)));  skip/up: (B, C, Hc, Wc) NCHW."""
    B, Cs, Hc, Wc = skip.shape
    Cu = up.shape[1]
    Co = ws.shape[2]
    HW = Hc * Wc

    # Per-lane fine-grid coordinates, precomputed in the wrapper (no int div in-kernel).
    pos = jnp.arange(HW, dtype=jnp.int32)
    row_idx = (pos // Wc).reshape(1, HW)
    col_idx = (pos % Wc).reshape(1, HW)

    out = pl.pallas_call(
        _make_fused_concat_conv3x3_relu_kernel(Hc, Wc, Cs, Cu, Co),
        out_shape=jax.ShapeDtypeStruct((B, Co, HW), skip.dtype),
        grid=(B,),
        in_specs=[
            pl.BlockSpec((1, HW), lambda b: (0, 0)),
            pl.BlockSpec((1, HW), lambda b: (0, 0)),
            pl.BlockSpec((1, Cs, HW), lambda b: (b, 0, 0)),
            pl.BlockSpec((1, Cu, HW), lambda b: (b, 0, 0)),
            pl.BlockSpec((3, 3, Co, Cs), lambda b: (0, 0, 0, 0)),
            pl.BlockSpec((3, 3, Co, Cu), lambda b: (0, 0, 0, 0)),
            pl.BlockSpec((Co, 1), lambda b: (0, 0)),
        ],
        out_specs=pl.BlockSpec((1, Co, HW), lambda b: (b, 0, 0)),
        compiler_params=pltpu.CompilerParams(
            dimension_semantics=("parallel",),
            vmem_limit_bytes=64 * 1024 * 1024,
        ),
    )(row_idx, col_idx,
      skip.reshape(B, Cs, HW), up.reshape(B, Cu, HW), ws, wu, b_col)
    return out.reshape(B, Co, Hc, Wc)


# ---------------------------------------------------------------------------
# UpConv stage + full decoder (NCHW end to end)
# ---------------------------------------------------------------------------
def upconv_stage(x1, x2, p):
    # x1: (B, Cin, H, W) coarse;  x2: (B, Cs, 2H, 2W) skip
    up = conv_transpose_2x2(x1, p["wt_all"], p["bt_all"])
    return concat_conv3x3_relu(x2, up, p["ws"], p["wu"], p["bc_col"])


def unet_decoder_forward(features, params):
    """Pallas forward of UNetDecoder; features ordered finest ... coarsest (NCHW)."""
    x = features[-1]
    for i, p in enumerate(params):
        x = upconv_stage(x, features[-i - 2], p)
    return x


def init_params(key, channels):
    params = []
    for i in range(len(channels) - 1):
        cin, cout = channels[i], channels[i + 1]
        cs = cin - cout            # skip channels (torch.cat([skip, up]) -> cs + cout = cin)
        key, k1, k2, k3, k4 = jax.random.split(key, 5)
        # PyTorch-layout parameters (also used by the pure-JAX reference):
        wt = jax.random.normal(k1, (cin, cout, 2, 2), jnp.float32) * (cin * 4) ** -0.5
        bt = jax.random.normal(k2, (cout,), jnp.float32) * 0.1
        wc = jax.random.normal(k3, (cout, cin, 3, 3), jnp.float32) * (cin * 9) ** -0.5
        bc = jax.random.normal(k4, (cout,), jnp.float32) * 0.1
        params.append(dict(
            wt=wt, bt=bt, wc=wc, bc=bc,
            # --- kernel-friendly layouts (wrapper-side plumbing) ---
            # ConvTranspose: all 4 taps stacked on the output-channel (sublane) axis,
            # row index = (2*kh + kw)*Cout + c.
            wt_all=jnp.transpose(wt, (2, 3, 1, 0)).reshape(4 * cout, cin),
            bt_all=jnp.tile(bt, 4).reshape(4 * cout, 1),
            # 3x3 conv split into skip / up halves (torch.cat order: [skip, up]).
            ws=jnp.transpose(wc[:, :cs], (2, 3, 0, 1)),   # (3, 3, Co, Cs)
            wu=jnp.transpose(wc[:, cs:], (2, 3, 0, 1)),   # (3, 3, Co, Cu)
            bc_col=bc.reshape(cout, 1),
        ))
    return params


# ---------------------------------------------------------------------------
# Pure-JAX reference (mirrors the PyTorch module exactly)
# ---------------------------------------------------------------------------
def _ref_conv_transpose_2x2(x, wt, bt):
    B, Cin, H, W = x.shape
    Cout = wt.shape[1]
    out = jnp.zeros((B, Cout, 2 * H, 2 * W), jnp.float32)
    for kh in range(2):
        for kw in range(2):
            y = jnp.einsum("bchw,cd->bdhw", x, wt[:, :, kh, kw],
                           precision=jax.lax.Precision.HIGHEST)
            out = out.at[:, :, kh::2, kw::2].set(y)
    return out + bt[None, :, None, None]


def _ref_conv3x3_relu(x, wc, bc):
    y = jax.lax.conv_general_dilated(
        x, wc, window_strides=(1, 1), padding=((1, 1), (1, 1)),
        dimension_numbers=("NCHW", "OIHW", "NCHW"),
        precision=jax.lax.Precision.HIGHEST)
    return jnp.maximum(y + bc[None, :, None, None], 0.0)


def ref_decoder(features, params):
    x = features[-1]
    for i, p in enumerate(params):
        up = _ref_conv_transpose_2x2(x, p["wt"], p["bt"])
        cat = jnp.concatenate([features[-i - 2], up], axis=1)  # torch.cat([x2, x1], 1)
        x = _ref_conv3x3_relu(cat, p["wc"], p["bc"])
    return x


# ---------------------------------------------------------------------------
if __name__ == "__main__":
    channels = (16, 8, 4)      # UNetDecoder(channels): UpConv(16->8), UpConv(8->4)
    B, H0, W0 = 2, 8, 8        # coarsest feature map is (B, 16, 8, 8)

    key = jax.random.PRNGKey(0)
    n = len(channels)
    fkeys = jax.random.split(key, n + 1)

    # features ordered finest first ... coarsest last (NCHW), like a UNet encoder output.
    features = []
    for j in range(n):
        c = channels[n - 1 - j]
        s = 2 ** (n - 1 - j)
        features.append(
            jax.random.normal(fkeys[j + 1], (B, c, H0 * s, W0 * s), jnp.float32))

    params = init_params(fkeys[0], channels)

    out = jax.block_until_ready(unet_decoder_forward(features, params))
    ref = jax.block_until_ready(ref_decoder(features, params))

    assert out.shape == ref.shape == (B, channels[-1],
                                      H0 * 2 ** (n - 1), W0 * 2 ** (n - 1))
    err = float(jnp.max(jnp.abs(out - ref)))
    scale = float(jnp.max(jnp.abs(ref)))
    assert err <= 2e-2 * max(1.0, scale), f"max abs err {err} (ref scale {scale})"
    print("KERNEL_OK")
</pallas_src>

<mosaic_0001>
module attributes {stable_mosaic.version = 11 : i64} {
  func.func @kernel(%arg0: i32, %arg1: memref<1x16x64xf32, #tpu.memory_space<vmem>>, %arg2: memref<32x16xf32, #tpu.memory_space<vmem>>, %arg3: memref<32x1xf32, #tpu.memory_space<vmem>>, %arg4: memref<1x32x64xf32, #tpu.memory_space<vmem>>) attributes {dimension_semantics = [#tpu.dimension_semantics<parallel>], iteration_bounds = array<i64: 2>, scalar_prefetch = 0 : i64, scratch_operands = 0 : i64, tpu.core_type = #tpu.core_type<tc>, window_params = [{transform_indices = @transform_0, window_bounds = array<i64: 1, 16, 64>}, {pipeline_mode = #tpu.pipeline_mode<synchronous>, transform_indices = @transform_1, window_bounds = array<i64: 32, 16>}, {pipeline_mode = #tpu.pipeline_mode<synchronous>, transform_indices = @transform_2, window_bounds = array<i64: 32, 1>}, {transform_indices = @transform_3, window_bounds = array<i64: 1, 32, 64>}]} {
    %c0 = arith.constant 0 : index
    %c0_0 = arith.constant 0 : index
    %0 = vector.load %arg2[%c0, %c0_0] : memref<32x16xf32, #tpu.memory_space<vmem>>, vector<32x16xf32>
    %c0_1 = arith.constant 0 : index
    %c0_2 = arith.constant 0 : index
    %c0_3 = arith.constant 0 : index
    %1 = vector.load %arg1[%c0_1, %c0_2, %c0_3] : memref<1x16x64xf32, #tpu.memory_space<vmem>>, vector<1x16x64xf32>
    %2 = vector.shape_cast %1 : vector<1x16x64xf32> to vector<16x64xf32>
    %cst = arith.constant dense<0.000000e+00> : vector<32x64xf32>
    %3 = tpu.matmul %0, %2, %cst {dimension_numbers = #tpu.dot_dimension_numbers<[1], [0], [0], [1], [0, 0, 1, 1], [], []>} : vector<32x16xf32>, vector<16x64xf32>, vector<32x64xf32> -> vector<32x64xf32>
    %c0_4 = arith.constant 0 : index
    %c0_5 = arith.constant 0 : index
    %4 = vector.load %arg3[%c0_4, %c0_5] : memref<32x1xf32, #tpu.memory_space<vmem>>, vector<32x1xf32>
    %5 = vector.broadcast %4 : vector<32x1xf32> to vector<32x64xf32>
    %6 = arith.addf %3, %5 : vector<32x64xf32>
    %c0_6 = arith.constant 0 : index
    %c0_7 = arith.constant 0 : index
    %c0_8 = arith.constant 0 : index
    %7 = vector.load %arg4[%c0_6, %c0_7, %c0_8] : memref<1x32x64xf32, #tpu.memory_space<vmem>>, vector<1x32x64xf32>
    %8 = vector.shape_cast %7 : vector<1x32x64xf32> to vector<32x64xf32>
    %9 = vector.shape_cast %6 : vector<32x64xf32> to vector<1x32x64xf32>
    tpu.vector_store %arg4[%c0_6, %c0_7, %c0_8], %9 {strides = array<i32>} : memref<1x32x64xf32, #tpu.memory_space<vmem>>, vector<1x32x64xf32>,
    return
  }
  func.func @transform_0(%arg0: i32) -> (i32, i32, i32) {
    %c0_i32 = arith.constant 0 : i32
    %c0_i32_0 = arith.constant 0 : i32
    %c0_i32_1 = arith.constant 0 : i32
    return %arg0, %c0_i32, %c0_i32_0 : i32, i32, i32
  }
  func.func @transform_1(%arg0: i32) -> (i32, i32) {
    %c0_i32 = arith.constant 0 : i32
    %c0_i32_0 = arith.constant 0 : i32
    %c0_i32_1 = arith.constant 0 : i32
    return %c0_i32, %c0_i32_0 : i32, i32
  }
  func.func @transform_2(%arg0: i32) -> (i32, i32) {
    %c0_i32 = arith.constant 0 : i32
    %c0_i32_0 = arith.constant 0 : i32
    %c0_i32_1 = arith.constant 0 : i32
    return %c0_i32, %c0_i32_0 : i32, i32
  }
  func.func @transform_3(%arg0: i32) -> (i32, i32, i32) {
    %c0_i32 = arith.constant 0 : i32
    %c0_i32_0 = arith.constant 0 : i32
    %c0_i32_1 = arith.constant 0 : i32
    return %arg0, %c0_i32, %c0_i32_0 : i32, i32, i32
  }
}

</mosaic_0001>

<llo_original>
// kernel: tpu_custom_call.1
$region0: #{tpu_custom_call.1}
  #allocation0 [shape = 'u32[]', space=smem, size = 0x4, offset = 0x4, fixed_abs, tag = 'smem constant byte address 0x4 - core index']
  #allocation1 [shape = 'u32[144,128]{1,0:T(1,128)}', space=vmem, size = 0x12000, scoped, tag = 'internal scratch']
  %s0 = inlined_call_operand.hbm [shape: f32[2,16,64], index: 0, kind: input, shape index: {}]
  %s1 = inlined_call_operand.hbm [shape: f32[32,16], index: 1, kind: input, shape index: {}]
  %s2 = inlined_call_operand.hbm [shape: f32[32,1], index: 2, kind: input, shape index: {}]
  %s3 = inlined_call_operand.hbm [shape: f32[2,32,64], index: 3, kind: output, shape index: {}]
  %s4 = sld [smem:[#allocation0]]
  $region57: #{tpu_custom_call.1} parent=0
    _
  %s6 = ssub.s32 1, %s4
  %s7 = scalar_select 0, %s6, %s4
  $region1: #{tpu_custom_call.1} parent=0
    #allocation2 [shape = 'u8[16384]{0}', space=vmem, size = 0x4000, scoped, tag = 'input window, operand 0']
    #allocation3 [shape = 's32[2]{0}', space=sflag, size = 0x8, scoped, tag = 'scoped memory for tpu_custom_call.1']
    #allocation4 [shape = 's32[2]{0}', space=sflag, size = 0x8, scoped, tag = 'scoped memory for tpu_custom_call.1']
    #allocation5 [shape = 'u8[16384]{0}', space=vmem, size = 0x4000, scoped, tag = 'input window, operand 1, single buffered']
    #allocation6 [shape = 's32[1]{0}', space=sflag, size = 0x4, scoped, tag = 'scoped memory for tpu_custom_call.1']
    #allocation7 [shape = 'u8[16384]{0}', space=vmem, size = 0x4000, scoped, tag = 'input window, operand 2, single buffered']
    #allocation8 [shape = 'u8[32768]{0}', space=vmem, size = 0x8000, scoped, tag = 'output window, operand 0']
    %8 = vsyncpa [#allocation3], 0
    %s9 = scalar_lea.sflag [#allocation3], 1
    %10 = vsyncpa %s9, 0
    %11 = vsyncpa [#allocation6], 0
    %12 = vsyncpa [#allocation4], 0
    %s13 = scalar_lea.sflag [#allocation4], 1
    %14 = vsyncpa %s13, 0
    loop: start=0, step=1, limit=4
    $region2: #{tpu_custom_call.1} parent=1 // loop_pre_header
      _
    $region3: #{tpu_custom_call.1} parent=1 // loop_header
      %s16 = sphi 0, %s20
      %p17 = scmp.ge.s32.totalorder %s16, 4
      %s26 = sphi 0, %s28
      %s29 = sphi 0, %s26
      %s30 = sphi 0, %s29
      %s46 = sphi 0, %s30
      %s50 = sphi 0, %s50
      %s52 = sphi 0, %s50
      %s53 = sphi 0, %s52
      %s67 = sphi 0, %s53
      %s71 = sphi 0, %s71
      %s73 = sphi 0, %s71
      %s74 = sphi 0, %s73
      %s88 = sphi 0, %s74
      %s94 = sphi 0, %s96
      %s97 = sphi 0, %s94
      %s98 = sphi 0, %s97
      %s114 = sphi 0, %s98
    $region4: #{tpu_custom_call.1} parent=1 // loop_header_branch
      %19 = sbr.rel (%p17) target = $region8
    $region5: #{tpu_custom_call.1} parent=1 // loop_body
      %s21 = ssub.s32 %s16, 1
      %s22 = ssub.s32 %s16, 2
      %s23 = sadd.s32 %s16, 1
      %s24 = ssub.s32 %s16, %s23
      %p25 = scmp.eq.s32.totalorder %s24, 0
      %s27 = sadd.s32 %s26, 1
      %s28 = scalar_select %p25, %s26, %s27
      %p31 = pneg %p25
      %p32 = scmp.eq.s32.totalorder %s16, 1
      %p33 = por %p31, %p32
      %p34 = scmp.ne.s32.totalorder %s26, %s29
      %p35 = scmp.eq.s32.totalorder %s16, 0
      %p36 = por %p34, %p35
      %p37 = scmp.ne.s32.totalorder %s26, %s29
      %p38 = scmp.eq.s32.totalorder %s21, 1
      %p39 = por %p37, %p38
      %p40 = scmp.ne.s32.totalorder %s29, %s30
      %p41 = scmp.eq.s32.totalorder %s21, 0
      %p42 = por %p40, %p41
      %p43 = scmp.ne.s32.totalorder %s29, %s30
      %p44 = scmp.eq.s32.totalorder %s22, 1
      %p45 = por %p43, %p44
      %p47 = scmp.ne.s32.totalorder %s30, %s46
      %p48 = scmp.eq.s32.totalorder %s22, 0
      %p49 = por %p47, %p48
      %s51 = sadd.s32 %s50, 1
      %p54 = scmp.eq.s32.totalorder %s16, 1
      %p55 = scmp.ne.s32.totalorder %s50, %s52
      %p56 = scmp.eq.s32.totalorder %s16, 0
      %p57 = por %p55, %p56
      %p58 = scmp.ne.s32.totalorder %s50, %s52
      %p59 = scmp.eq.s32.totalorder %s21, 1
      %p60 = por %p58, %p59
      %p61 = scmp.ne.s32.totalorder %s52, %s53
      %p62 = scmp.eq.s32.totalorder %s21, 0
      %p63 = por %p61, %p62
      %p64 = scmp.ne.s32.totalorder %s52, %s53
      %p65 = scmp.eq.s32.totalorder %s22, 1
      %p66 = por %p64, %p65
      %p68 = scmp.ne.s32.totalorder %s53, %s67
      %p69 = scmp.eq.s32.totalorder %s22, 0
      %p70 = por %p68, %p69
      %s72 = sadd.s32 %s71, 1
      %p75 = scmp.eq.s32.totalorder %s16, 1
      %p76 = scmp.ne.s32.totalorder %s71, %s73
      %p77 = scmp.eq.s32.totalorder %s16, 0
      %p78 = por %p76, %p77
      %p79 = scmp.ne.s32.totalorder %s71, %s73
      %p80 = scmp.eq.s32.totalorder %s21, 1
      %p81 = por %p79, %p80
      %p82 = scmp.ne.s32.totalorder %s73, %s74
      %p83 = scmp.eq.s32.totalorder %s21, 0
      %p84 = por %p82, %p83
      %p85 = scmp.ne.s32.totalorder %s73, %s74
      %p86 = scmp.eq.s32.totalorder %s22, 1
      %p87 = por %p85, %p86
      %p89 = scmp.ne.s32.totalorder %s74, %s88
      %p90 = scmp.eq.s32.totalorder %s22, 0
      %p91 = por %p89, %p90
      %s92 = ssub.s32 %s16, %s23
      %p93 = scmp.eq.s32.totalorder %s92, 0
      %s95 = sadd.s32 %s94, 1
      %s96 = scalar_select %p93, %s94, %s95
      %p99 = pneg %p93
      %p100 = scmp.eq.s32.totalorder %s16, 1
      %p101 = por %p99, %p100
      %p102 = scmp.ne.s32.totalorder %s94, %s97
      %p103 = scmp.eq.s32.totalorder %s16, 0
      %p104 = por %p102, %p103
      %p105 = scmp.ne.s32.totalorder %s94, %s97
      %p106 = scmp.eq.s32.totalorder %s21, 1
      %p107 = por %p105, %p106
      %p108 = scmp.ne.s32.totalorder %s97, %s98
      %p109 = scmp.eq.s32.totalorder %s21, 0
      %p110 = por %p108, %p109
      %p111 = scmp.ne.s32.totalorder %s97, %s98
      %p112 = scmp.eq.s32.totalorder %s22, 1
      %p113 = por %p111, %p112
      %p115 = scmp.ne.s32.totalorder %s98, %s114
      %p116 = scmp.eq.s32.totalorder %s22, 0
      %p117 = por %p115, %p116
      %p118 = scmp.le.s32.totalorder 1, %s16
      %p119 = scmp.lt.s32.totalorder %s16, 3
      %p120 = pnand %p118, %p119
      %p121 = pneg %p120
      // Predicated region
      $region9: #{tpu_custom_call.1} parent=5 // pred_check
        _
      $region10: #{tpu_custom_call.1} parent=5 // pred_check_branch
        %123 = sbr.rel (%p120) target = $region12
      $region11: #{tpu_custom_call.1} parent=5 // pred_region
        %s124 = ssub.s32 %s16, 1
        // Predicated region
        $region13: #{tpu_custom_call.1} parent=11 // pred_check
          %p125 = pneg %p63
        $region14: #{tpu_custom_call.1} parent=11 // pred_check_branch
          %127 = sbr.rel (%p125) target = $region16
        $region15: #{tpu_custom_call.1} parent=11 // pred_region
          %s129 = ssub.s32 512, 512
          %130 = vsyncadd [#allocation6], %s129
          %s131 = sshll.u32 [#allocation5], 4
          %s132 = int_to_ptr.vmem [resolvable:$true] %s131
          %137 = dma.hbm_to_vmem [thread:$0]  %s1, 512, %s132, [#allocation6], 128, 128, 8
        $region16: #{tpu_custom_call.1} parent=11 // pred_fallthru
          _
        // Predicated region
        $region17: #{tpu_custom_call.1} parent=11 // pred_check
          %p138 = pneg %p84
        $region18: #{tpu_custom_call.1} parent=11 // pred_check_branch
          %140 = sbr.rel (%p138) target = $region20
        $region19: #{tpu_custom_call.1} parent=11 // pred_region
          %s142 = ssub.s32 512, 512
          %143 = vsyncadd [#allocation6], %s142
          %s144 = sshll.u32 [#allocation7], 4
          %s145 = int_to_ptr.vmem [resolvable:$true] %s144
          %150 = dma.hbm_to_vmem [thread:$0]  %s2, 512, %s145, [#allocation6], 128, 128, 8
        $region20: #{tpu_custom_call.1} parent=11 // pred_fallthru
          _
      $region12: #{tpu_custom_call.1} parent=5 // pred_fallthru
        _
      %p151 = scmp.lt.s32.totalorder %s16, 2
      // Predicated region
      $region21: #{tpu_custom_call.1} parent=5 // pred_check
        %p152 = pneg %p151
      $region22: #{tpu_custom_call.1} parent=5 // pred_check_branch
        %154 = sbr.rel (%p152) target = $region24
      $region23: #{tpu_custom_call.1} parent=5 // pred_region
        // Predicated region
        $region25: #{tpu_custom_call.1} parent=23 // pred_check
          %p155 = pneg %p36
        $region26: #{tpu_custom_call.1} parent=23 // pred_check_branch
          %157 = sbr.rel (%p155) target = $region28
        $region27: #{tpu_custom_call.1} parent=23 // pred_region
          %s158 = sand.u32 %s26, 1
          %s159 = scalar_lea.sflag [#allocation3], %s158
          %s160 = sand.u32 %s26, 1
          %s161 = smul.addr %s160, 16
          %s162 = scalar_lea.vmem [#allocation2], %s161
          %s164 = ssub.s32 256, 256
          %165 = vsyncadd %s159, %s164
          %s166 = smul.addr %s16, 2
          %s167 = smul.addr %s166, 128
          %s168 = scalar_lea.hbm %s0, %s167
          %s169 = sshll.u32 %s162, 4
          %s170 = int_to_ptr.vmem [resolvable:$true] %s169
          %175 = dma.hbm_to_vmem [thread:$0]  %s168, 256, %s170, %s159, 128, 128, 8
        $region28: #{tpu_custom_call.1} parent=23 // pred_fallthru
          _
      $region24: #{tpu_custom_call.1} parent=5 // pred_fallthru
        _
      %p176 = scmp.le.s32.totalorder 1, %s16
      %p177 = scmp.lt.s32.totalorder %s16, 3
      %p178 = pnand %p176, %p177
      %p179 = pneg %p178
      // Predicated region
      $region29: #{tpu_custom_call.1} parent=5 // pred_check
        _
      $region30: #{tpu_custom_call.1} parent=5 // pred_check_branch
        %181 = sbr.rel (%p178) target = $region32
      $region31: #{tpu_custom_call.1} parent=5 // pred_region
        %s182 = ssub.s32 %s16, 1
        %s183 = sand.u32 %s29, 1
        %s184 = scalar_lea.sflag [#allocation3], %s183
        %s185 = sand.u32 %s29, 1
        %s186 = smul.addr %s185, 16
        %s187 = scalar_lea.vmem [#allocation2], %s186
        // Predicated region
        $region33: #{tpu_custom_call.1} parent=31 // pred_check
          %p188 = pneg %p42
        $region34: #{tpu_custom_call.1} parent=31 // pred_check_branch
          %190 = sbr.rel (%p188) target = $region36
        $region35: #{tpu_custom_call.1} parent=31 // pred_region
          %191 = dma.done %s184, 256
        $region36: #{tpu_custom_call.1} parent=31 // pred_fallthru
          _
        // Predicated region
        $region37: #{tpu_custom_call.1} parent=31 // pred_check
          %p192 = pneg %p63
        $region38: #{tpu_custom_call.1} parent=31 // pred_check_branch
          %194 = sbr.rel (%p192) target = $region40
        $region39: #{tpu_custom_call.1} parent=31 // pred_region
          %195 = dma.done [#allocation6], 512
        $region40: #{tpu_custom_call.1} parent=31 // pred_fallthru
          _
        // Predicated region
        $region41: #{tpu_custom_call.1} parent=31 // pred_check
          %p196 = pneg %p84
        $region42: #{tpu_custom_call.1} parent=31 // pred_check_branch
          %198 = sbr.rel (%p196) target = $region44
        $region43: #{tpu_custom_call.1} parent=31 // pred_region
          %199 = dma.done [#allocation6], 512
        $region44: #{tpu_custom_call.1} parent=31 // pred_fallthru
          _
        %s200 = sand.u32 %s29, 1
        %s201 = scalar_lea.sflag [#allocation3], %s200
        %s202 = sand.u32 %s29, 1
        %s203 = smul.addr %s202, 16
        %s204 = scalar_lea.vmem [#allocation2], %s203
        %p205 = pneg %p42
        %p206 = pneg %p39
        %p207 = pneg %p63
        %p208 = pneg %p60
        %p209 = pneg %p84
        %p210 = pneg %p81
        %p211 = pneg %p110
        %p212 = pneg %p107
        %s213 = sand.u32 %s97, 1
        %s214 = scalar_lea.sflag [#allocation4], %s213
        %s215 = sand.u32 %s97, 1
        %s216 = smul.addr %s215, 32
        %s217 = scalar_lea.vmem [#allocation8], %s216
        %v218 = vld [vmem:[#allocation5] sm:$0xff]
        %v219 = vld [vmem:[#allocation5 + $0x8] sm:$0xff]
        %v220 = vld [vmem:[#allocation5 + $0x10] sm:$0xff]
        %v221 = vld [vmem:[#allocation5 + $0x18] sm:$0xff]
        %v222 = vld [vmem:[%s187] sm:$0xff]
        %v223 = vld [vmem:[%s187 + $0x8] sm:$0xff]
        %v224 = vld [vmem:[#allocation7] sm:$0xff]
        %v225 = vld [vmem:[#allocation7 + $0x8] sm:$0xff]
        %v226 = vld [vmem:[#allocation7 + $0x10] sm:$0xff]
        %v227 = vld [vmem:[#allocation7 + $0x18] sm:$0xff]
        %229 = vset.pattern.permute.xlu0 0
        %230 = vperm.xlu0 %229, %v224
        %v231 = vpop.permute.xlu0 %230
        %234 = vset.pattern.permute.xlu0 0
        %235 = vperm.xlu0 %234, %v225
        %v236 = vpop.permute.xlu0 %235
        %239 = vset.pattern.permute.xlu0 0
        %240 = vperm.xlu0 %239, %v226
        %v241 = vpop.permute.xlu0 %240
        %244 = vset.pattern.permute.xlu0 0
        %245 = vperm.xlu0 %244, %v227
        %v246 = vpop.permute.xlu0 %245
        %vm248 = vcmask 130048
        %v250 = vsel %vm248, %v218, 0
        %v253 = vsel %vm248, %v219, 0
        %v256 = vsel %vm248, %v220, 0
        %v259 = vsel %vm248, %v221, 0
        %261 = vmatprep.subr.mxu0 0.0
        %262 = vmatpush1.msra.mxu0 %v222
        %263 = vmatprep.subr.mxu0 0.0
        %264 = vmatpush1.msra.mxu0 %v223
        %265 = vmatprep.subr.mxu0 0.0
        %266 = vmatpush1.msra.mxu0 0.0
        %267 = vmatprep.subr.mxu0 0.0
        %268 = vmatpush1.msra.mxu0 0.0
        %269 = vmatprep.subr.mxu0 0.0
        %270 = vmatpush1.msra.mxu0 0.0
        %271 = vmatprep.subr.mxu0 0.0
        %272 = vmatpush1.msra.mxu0 0.0
        %273 = vmatprep.subr.mxu0 0.0
        %274 = vmatpush1.msra.mxu0 0.0
        %275 = vmatprep.subr.mxu0 0.0
        %276 = vmatpush1.msra.mxu0 0.0
        %277 = vmatprep.subr.mxu0 0.0
        %278 = vmatpush1.msra.mxu0 0.0
        %279 = vmatprep.subr.mxu0 0.0
        %280 = vmatpush1.msra.mxu0 0.0
        %281 = vmatprep.subr.mxu0 0.0
        %282 = vmatpush1.msra.mxu0 0.0
        %283 = vmatprep.subr.mxu0 0.0
        %284 = vmatpush1.msra.mxu0 0.0
        %285 = vmatprep.subr.mxu0 0.0
        %286 = vmatpush1.msra.mxu0 0.0
        %287 = vmatprep.subr.mxu0 0.0
        %288 = vmatpush1.msra.mxu0 0.0
        %289 = vmatprep.subr.mxu0 0.0
        %290 = vmatpush1.msra.mxu0 0.0
        %291 = vmatprep.subr.mxu0 0.0
        %292 = vmatpush1.msra.mxu0 0.0
        %293 = vmatprep.subr.mxu0 0.0
        %294 = vmatpush1.msra.mxu0 0.0
        %295 = vmatprep.subr.mxu0 0.0
        %296 = vmatpush1.msra.mxu0 0.0
        %297 = vmatprep.subr.mxu0 0.0
        %298 = vmatpush1.msra.mxu0 0.0
        %299 = vmatprep.subr.mxu0 0.0
        %300 = vmatpush1.msra.mxu0 0.0
        %301 = vmatprep.subr.mxu0 0.0
        %302 = vmatpush1.msra.mxu0 0.0
        %303 = vmatprep.subr.mxu0 0.0
        %304 = vmatpush1.msra.mxu0 0.0
        %305 = vmatprep.subr.mxu0 0.0
        %306 = vmatpush1.msra.mxu0 0.0
        %307 = vmatprep.subr.mxu0 0.0
        %308 = vmatpush1.msra.mxu0 0.0
        %309 = vmatprep.subr.mxu0 0.0
        %310 = vmatpush1.msra.mxu0 0.0
        %311 = vmatprep.subr.mxu0 0.0
        %312 = vmatpush1.msra.mxu0 0.0
        %313 = vmatprep.subr.mxu0 0.0
        %314 = vmatpush1.msra.mxu0 0.0
        %315 = vmatprep.subr.mxu0 0.0
        %316 = vmatpush1.msra.mxu0 0.0
        %317 = vmatprep.subr.mxu0 0.0
        %318 = vmatpush1.msra.mxu0 0.0
        %319 = vmatprep.subr.mxu0 0.0
        %320 = vmatpush1.msra.mxu0 0.0
        %321 = vmatprep.subr.mxu0 0.0
        %322 = vmatpush1.msra.mxu0 0.0
        %323 = vmatprep.subr.mxu0 0.0
        %324 = vmatpush1.msra.mxu0 0.0
        %325 = vmatprep.mubr.f32.mxu0 0.0
        %326 = vmatmul.mubr.f32.gmra.mrb[0].mxu0 %v250
        %v327 = vpop.f32.mrb[0].mxu0
        %v328 = vadd.f32 %v231, %v327
        %v329 = vpop.f32.mrb[0].mxu0
        %330 = vmatprep.mubr.f32.mxu0 0.0
        %331 = vmatmul.mubr.f32.gmra.mrb[0].mxu0 %v253
        %v332 = vpop.f32.mrb[0].mxu0
        %v333 = vadd.f32 %v236, %v332
        %v334 = vpop.f32.mrb[0].mxu0
        %335 = vmatprep.mubr.f32.mxu0 0.0
        %336 = vmatmul.mubr.f32.gmra.mrb[0].mxu0 %v256
        %v337 = vpop.f32.mrb[0].mxu0
        %v338 = vadd.f32 %v241, %v337
        %v339 = vpop.f32.mrb[0].mxu0
        %340 = vmatprep.mubr.f32.mxu0 0.0
        %341 = vmatmul.mubr.f32.gmra.mrb[0].mxu0 %v259
        %v342 = vpop.f32.mrb[0].mxu0
        %v343 = vadd.f32 %v246, %v342
        %v344 = vpop.f32.mrb[0].mxu0
        %345 = vdwg.mxu0
        %vm346 = vcmask 523264
        %347 = vst.msk [vmem:[%s217] sm:$0xff] %vm346, %v328
        %348 = vst.msk [vmem:[%s217 + $0x8] sm:$0xff] %vm346, %v333
        %349 = vst.msk [vmem:[%s217 + $0x10] sm:$0xff] %vm346, %v338
        %350 = vst.msk [vmem:[%s217 + $0x18] sm:$0xff] %vm346, %v343
        %s351 = sand.u32 %s97, 1
        %s352 = scalar_lea.sflag [#allocation4], %s351
        %s353 = sand.u32 %s97, 1
        %s354 = smul.addr %s353, 32
        %s355 = scalar_lea.vmem [#allocation8], %s354
        // Predicated region
        $region45: #{tpu_custom_call.1} parent=31 // pred_check
          %p356 = pneg %p107
        $region46: #{tpu_custom_call.1} parent=31 // pred_check_branch
          %358 = sbr.rel (%p356) target = $region48
        $region47: #{tpu_custom_call.1} parent=31 // pred_region
          %s360 = ssub.s32 512, 512
          %361 = vsyncadd %s352, %s360
          %s362 = smul.addr %s21, 4
          %s363 = smul.addr %s362, 128
          %s364 = scalar_lea.hbm %s3, %s363
          %s365 = sshll.u32 %s355, 4
          %s366 = int_to_ptr.vmem [resolvable:$true] %s365
          %371 = dma.vmem_to_hbm [thread:$0]  %s366, 512, %s364, %s352, 128, 128, 8
        $region48: #{tpu_custom_call.1} parent=31 // pred_fallthru
          _
      $region32: #{tpu_custom_call.1} parent=5 // pred_fallthru
        _
      %p372 = scmp.le.s32.totalorder 2, %s16
      // Predicated region
      $region49: #{tpu_custom_call.1} parent=5 // pred_check
        %p373 = pneg %p372
      $region50: #{tpu_custom_call.1} parent=5 // pred_check_branch
        %375 = sbr.rel (%p373) target = $region52
      $region51: #{tpu_custom_call.1} parent=5 // pred_region
        %s376 = ssub.s32 %s16, 2
        // Predicated region
        $region53: #{tpu_custom_call.1} parent=51 // pred_check
          %p377 = pneg %p113
        $region54: #{tpu_custom_call.1} parent=51 // pred_check_branch
          %379 = sbr.rel (%p377) target = $region56
        $region55: #{tpu_custom_call.1} parent=51 // pred_region
          %s380 = sand.u32 %s98, 1
          %s381 = scalar_lea.sflag [#allocation4], %s380
          %s382 = sand.u32 %s98, 1
          %s383 = smul.addr %s382, 32
          %s384 = scalar_lea.vmem [#allocation8], %s383
          %385 = dma.done %s381, 512
        $region56: #{tpu_custom_call.1} parent=51 // pred_fallthru
          _
      $region52: #{tpu_custom_call.1} parent=5 // pred_fallthru
        _
    $region6: #{tpu_custom_call.1} parent=1 // loop_footer
      %s20 = sadd.s32 1, %s16
    $region7: #{tpu_custom_call.1} parent=1 // loop_footer_branch
      %15 = sbr.rel target = $region3
    $region8: #{tpu_custom_call.1} parent=1 // loop_exit
      _
    %386 = vsyncpa [#allocation3], 1
    %s387 = scalar_lea.sflag [#allocation3], 1
    %388 = vsyncpa %s387, 1
    %389 = vsyncpa [#allocation6], 1
    %390 = vsyncpa [#allocation4], 1
    %s391 = scalar_lea.sflag [#allocation4], 1
    %392 = vsyncpa %s391, 1

</llo_original>
